<compile_context>
chip_gen: v7x
topology: tpu7x:2x2x1
jax: 0.10.0
libtpu: 0.0.40
codegen_flags: <defaults>
</compile_context>

<pallas_src>
import jax
import jax.numpy as jnp
from jax.experimental import pallas as pl
from jax.experimental.pallas import tpu as pltpu

_TARGET_BLOCK_BYTES = 1 << 20          # ~1 MiB per input per grid step
_MIN_VMEM_LIMIT = 32 * (1 << 20)       # safe scoped-VMEM request on v5e/v6e/v7x


def _round_up(x, m):
    return (x + m - 1) // m * m


def _pick_batch_tile(n, h, w):
    """Largest divisor of n whose VMEM-padded plane block stays ~1 MiB."""
    plane_bytes = _round_up(h, 8) * _round_up(w, 128) * 4
    best = 1
    for d in range(1, n + 1):
        if n % d == 0 and d * plane_bytes <= _TARGET_BLOCK_BYTES:
            best = d
    return best, plane_bytes


def _regr_h_loss_kernel(p_ref, t_ref, m_ref, loss_ref, wsum_ref):
    """One batch tile: partial sums of mask*smooth_l1(pred, tgt) and of mask."""
    p = p_ref[...].astype(jnp.float32)   # (TB, H, W)
    t = t_ref[...].astype(jnp.float32)
    w = m_ref[...].astype(jnp.float32)

    diff = p - t
    adiff = jnp.abs(diff)
    # SmoothL1 (beta = 1.0): 0.5*x^2 if |x| < 1 else |x| - 0.5
    sl1 = jnp.where(adiff < 1.0, 0.5 * diff * diff, adiff - 0.5)

    # Leading-axis reduce first (VPU adds), then one small 2-D reduce (XLU tail).
    loss_ref[0, 0] = jnp.sum(jnp.sum(w * sl1, axis=0))
    wsum_ref[0, 0] = jnp.sum(jnp.sum(w, axis=0))


@jax.jit
def regr_h_loss(pred, target, loss_weight=1.0):
    """pred: (N, C, H, W), target: (N, 2, H, W) -> scalar loss (f32)."""
    n, _, h, w = pred.shape
    tb, plane_bytes = _pick_batch_tile(n, h, w)
    grid = (n // tb,)

    plane_block = (tb, None, h, w)       # channel dim squeezed out of the kernel Ref
    pred_spec = pl.BlockSpec(plane_block, lambda i: (i, 0, 0, 0))   # pred[:, 0]
    tval_spec = pl.BlockSpec(plane_block, lambda i: (i, 0, 0, 0))   # target[:, 0]
    tmsk_spec = pl.BlockSpec(plane_block, lambda i: (i, 1, 0, 0))   # target[:, 1]

    out_spec = pl.BlockSpec((1, 1), lambda i: (i, 0), memory_space=pltpu.SMEM)
    out_shape = jax.ShapeDtypeStruct((grid[0], 1), jnp.float32)

    vmem_needed = 3 * 2 * tb * plane_bytes + (1 << 20)   # inputs x dbl-buffer + slack
    vmem_limit = int(max(vmem_needed, _MIN_VMEM_LIMIT))

    loss_parts, w_parts = pl.pallas_call(
        _regr_h_loss_kernel,
        out_shape=(out_shape, out_shape),
        grid_spec=pltpu.PrefetchScalarGridSpec(
            num_scalar_prefetch=0,
            grid=grid,
            in_specs=[pred_spec, tval_spec, tmsk_spec],
            out_specs=(out_spec, out_spec),
        ),
        compiler_params=pltpu.CompilerParams(
            dimension_semantics=("parallel",),
            vmem_limit_bytes=vmem_limit,
        ),
    )(pred, target, target)

    loss_sum = jnp.sum(loss_parts)
    pos_h_nums = jnp.maximum(jnp.float32(1.0), jnp.sum(w_parts))
    return jnp.asarray(loss_weight, jnp.float32) * loss_sum / pos_h_nums


def _reference(pred, target, loss_weight):
    diff = pred[:, 0, :, :] - target[:, 0, :, :]
    adiff = jnp.abs(diff)
    sl1 = jnp.where(adiff < 1.0, 0.5 * diff * diff, adiff - 0.5)
    loss = target[:, 1, :, :] * sl1
    pos = jnp.maximum(1.0, jnp.sum(target[:, 1, :, :]))
    return loss_weight * jnp.sum(loss) / pos


if __name__ == "__main__":
    key = jax.random.PRNGKey(0)
    k1, k2, k3 = jax.random.split(key, 3)

    N, C, H, W = 2, 4, 16, 16
    loss_weight = 0.5

    pred = jax.random.normal(k1, (N, C, H, W), dtype=jnp.float32)
    tgt_val = jax.random.normal(k2, (N, 1, H, W), dtype=jnp.float32)
    tgt_mask = (jax.random.uniform(k3, (N, 1, H, W)) > 0.5).astype(jnp.float32)
    target = jnp.concatenate([tgt_val, tgt_mask], axis=1)  # (N, 2, H, W)

    out = regr_h_loss(pred, target, loss_weight)
    out = jax.block_until_ready(out)

    ref = _reference(pred, target, loss_weight)
    assert jnp.allclose(out, ref, rtol=1e-5, atol=1e-6), (out, ref)

    print("KERNEL_OK")
</pallas_src>

<mosaic_0001>
module attributes {stable_mosaic.version = 11 : i64} {
  func.func @_regr_h_loss_kernel(%arg0: i32, %arg1: memref<2x1x16x16xf32, #tpu.memory_space<vmem>>, %arg2: memref<2x1x16x16xf32, #tpu.memory_space<vmem>>, %arg3: memref<2x1x16x16xf32, #tpu.memory_space<vmem>>, %arg4: memref<1x1xf32, #tpu.memory_space<smem>>, %arg5: memref<1x1xf32, #tpu.memory_space<smem>>) attributes {dimension_semantics = [#tpu.dimension_semantics<parallel>], iteration_bounds = array<i64: 1>, scalar_prefetch = 0 : i64, scratch_operands = 0 : i64, tpu.core_type = #tpu.core_type<tc>, window_params = [{transform_indices = @transform_0, window_bounds = array<i64: 2, 1, 16, 16>}, {transform_indices = @transform_1, window_bounds = array<i64: 2, 1, 16, 16>}, {transform_indices = @transform_2, window_bounds = array<i64: 2, 1, 16, 16>}, {transform_indices = @transform_3, window_bounds = array<i64: 1, 1>}, {transform_indices = @transform_4, window_bounds = array<i64: 1, 1>}]} {
    %c0 = arith.constant 0 : index
    %c0_0 = arith.constant 0 : index
    %c0_1 = arith.constant 0 : index
    %c0_2 = arith.constant 0 : index
    %0 = vector.load %arg1[%c0, %c0_0, %c0_1, %c0_2] : memref<2x1x16x16xf32, #tpu.memory_space<vmem>>, vector<2x1x16x16xf32>
    %1 = vector.shape_cast %0 : vector<2x1x16x16xf32> to vector<2x16x16xf32>
    %c0_3 = arith.constant 0 : index
    %c0_4 = arith.constant 0 : index
    %c0_5 = arith.constant 0 : index
    %c0_6 = arith.constant 0 : index
    %2 = vector.load %arg2[%c0_3, %c0_4, %c0_5, %c0_6] : memref<2x1x16x16xf32, #tpu.memory_space<vmem>>, vector<2x1x16x16xf32>
    %3 = vector.shape_cast %2 : vector<2x1x16x16xf32> to vector<2x16x16xf32>
    %c0_7 = arith.constant 0 : index
    %c0_8 = arith.constant 0 : index
    %c0_9 = arith.constant 0 : index
    %c0_10 = arith.constant 0 : index
    %4 = vector.load %arg3[%c0_7, %c0_8, %c0_9, %c0_10] : memref<2x1x16x16xf32, #tpu.memory_space<vmem>>, vector<2x1x16x16xf32>
    %5 = vector.shape_cast %4 : vector<2x1x16x16xf32> to vector<2x16x16xf32>
    %6 = arith.subf %1, %3 : vector<2x16x16xf32>
    %7 = math.absf %6 : vector<2x16x16xf32>
    %cst = arith.constant 1.000000e+00 : f32
    %8 = vector.broadcast %cst : f32 to vector<2x16x16xf32>
    %9 = arith.cmpf olt, %7, %8 : vector<2x16x16xf32>
    %cst_11 = arith.constant 5.000000e-01 : f32
    %10 = vector.broadcast %cst_11 : f32 to vector<2x16x16xf32>
    %11 = arith.mulf %10, %6 : vector<2x16x16xf32>
    %12 = arith.mulf %11, %6 : vector<2x16x16xf32>
    %cst_12 = arith.constant 5.000000e-01 : f32
    %13 = vector.broadcast %cst_12 : f32 to vector<2x16x16xf32>
    %14 = arith.subf %7, %13 : vector<2x16x16xf32>
    %15 = arith.select %9, %12, %14 : vector<2x16x16xi1>, vector<2x16x16xf32>
    %16 = arith.mulf %5, %15 : vector<2x16x16xf32>
    %cst_13 = arith.constant dense<0.000000e+00> : vector<16x16xf32>
    %17 = vector.multi_reduction <add>, %16, %cst_13 [0] : vector<2x16x16xf32> to vector<16x16xf32>
    %18 = vector.shape_cast %17 : vector<16x16xf32> to vector<1x16x16xf32>
    %cst_14 = arith.constant dense<0.000000e+00> : vector<1xf32>
    %19 = vector.multi_reduction <add>, %18, %cst_14 [1, 2] : vector<1x16x16xf32> to vector<1xf32>
    %20 = vector.shape_cast %19 : vector<1xf32> to vector<1x1x1xf32>
    %21 = vector.extract %20[0, 0, 0] : f32 from vector<1x1x1xf32>
    %c0_15 = arith.constant 0 : index
    %c0_16 = arith.constant 0 : index
    %22 = memref.load %arg4[%c0_15, %c0_16] : memref<1x1xf32, #tpu.memory_space<smem>>
    memref.store %21, %arg4[%c0_15, %c0_16] : memref<1x1xf32, #tpu.memory_space<smem>>
    %cst_17 = arith.constant dense<0.000000e+00> : vector<16x16xf32>
    %23 = vector.multi_reduction <add>, %5, %cst_17 [0] : vector<2x16x16xf32> to vector<16x16xf32>
    %24 = vector.shape_cast %23 : vector<16x16xf32> to vector<1x16x16xf32>
    %cst_18 = arith.constant dense<0.000000e+00> : vector<1xf32>
    %25 = vector.multi_reduction <add>, %24, %cst_18 [1, 2] : vector<1x16x16xf32> to vector<1xf32>
    %26 = vector.shape_cast %25 : vector<1xf32> to vector<1x1x1xf32>
    %27 = vector.extract %26[0, 0, 0] : f32 from vector<1x1x1xf32>
    %c0_19 = arith.constant 0 : index
    %c0_20 = arith.constant 0 : index
    %28 = memref.load %arg5[%c0_19, %c0_20] : memref<1x1xf32, #tpu.memory_space<smem>>
    memref.store %27, %arg5[%c0_19, %c0_20] : memref<1x1xf32, #tpu.memory_space<smem>>
    return
  }
  func.func @transform_0(%arg0: i32) -> (i32, i32, i32, i32) {
    %c0_i32 = arith.constant 0 : i32
    %c0_i32_0 = arith.constant 0 : i32
    %c0_i32_1 = arith.constant 0 : i32
    %c0_i32_2 = arith.constant 0 : i32
    return %arg0, %c0_i32, %c0_i32_0, %c0_i32_1 : i32, i32, i32, i32
  }
  func.func @transform_1(%arg0: i32) -> (i32, i32, i32, i32) {
    %c0_i32 = arith.constant 0 : i32
    %c0_i32_0 = arith.constant 0 : i32
    %c0_i32_1 = arith.constant 0 : i32
    %c0_i32_2 = arith.constant 0 : i32
    return %arg0, %c0_i32, %c0_i32_0, %c0_i32_1 : i32, i32, i32, i32
  }
  func.func @transform_2(%arg0: i32) -> (i32, i32, i32, i32) {
    %c1_i32 = arith.constant 1 : i32
    %c0_i32 = arith.constant 0 : i32
    %c0_i32_0 = arith.constant 0 : i32
    %c0_i32_1 = arith.constant 0 : i32
    return %arg0, %c1_i32, %c0_i32, %c0_i32_0 : i32, i32, i32, i32
  }
  func.func @transform_3(%arg0: i32) -> (i32, i32) {
    %c0_i32 = arith.constant 0 : i32
    %c0_i32_0 = arith.constant 0 : i32
    return %arg0, %c0_i32 : i32, i32
  }
  func.func @transform_4(%arg0: i32) -> (i32, i32) {
    %c0_i32 = arith.constant 0 : i32
    %c0_i32_0 = arith.constant 0 : i32
    return %arg0, %c0_i32 : i32, i32
  }
}

</mosaic_0001>

<llo_original>
// kernel: regr_h_loss.1
$region0: #{regr_h_loss.1}
  #allocation0 [shape = 'u32[]', space=smem, size = 0x4, offset = 0x4, fixed_abs, tag = 'smem constant byte address 0x4 - core index']
  #allocation1 [shape = 'u32[144,128]{1,0:T(1,128)}', space=vmem, size = 0x12000, scoped, tag = 'internal scratch']
  #allocation11 [shape = 's32[]', space=sflag, size = 0x4, offset = 0, fixed_abs, tag = 'sflag constant byte address 0x0 - dummy sync flag']
  #allocation13 [shape = 's32[]', space=sflag, size = 0x4, offset = 0, fixed_abs, tag = 'sflag constant byte address 0x0 - dummy sync flag']
  #allocation15 [shape = 's32[]', space=sflag, size = 0x4, offset = 0, fixed_abs, tag = 'sflag constant byte address 0x0 - dummy sync flag']
  %s0 = inlined_call_operand.hbm [shape: f32[2,4,16,16], index: 0, kind: input, shape index: {}]
  %s1 = inlined_call_operand.hbm [shape: f32[2,2,16,16], index: 1, kind: input, shape index: {}, may-alias: {1,2}]
  %s2 = inlined_call_operand.hbm [shape: f32[2,2,16,16], index: 2, kind: input, shape index: {}, may-alias: {1,2}]
  %s3 = inlined_call_operand.hbm [shape: f32[1,1], index: 3, kind: output, shape index: {0}]
  %s4 = inlined_call_operand.hbm [shape: f32[1,1], index: 4, kind: output, shape index: {1}]
  %5 = xla_tuple %s3, %s4
  %s6 = sld [smem:[#allocation0]]
  $region42: #{regr_h_loss.1} parent=0
    _
  %s8 = ssub.s32 1, %s6
  %s9 = scalar_select 0, %s8, %s6
  $region1: #{regr_h_loss.1} parent=0
    #allocation2 [shape = 'u8[16384]{0}', space=vmem, size = 0x4000, scoped, tag = 'input window, operand 0, single buffered']
    #allocation3 [shape = 's32[1]{0}', space=sflag, size = 0x4, scoped, tag = 'scoped memory for regr_h_loss.1']
    #allocation4 [shape = 's32[1]{0}', space=sflag, size = 0x4, scoped, tag = 'scoped memory for regr_h_loss.1']
    #allocation5 [shape = 'u8[16384]{0}', space=vmem, size = 0x4000, scoped, tag = 'input window, operand 1, single buffered']
    #allocation6 [shape = 's32[1]{0}', space=sflag, size = 0x4, scoped, tag = 'scoped memory for regr_h_loss.1']
    #allocation7 [shape = 'u8[16384]{0}', space=vmem, size = 0x4000, scoped, tag = 'input window, operand 2, single buffered']
    #allocation8 [shape = 'u8[512]{0}', space=smem, size = 0x200, scoped, tag = 'output window, operand 0, single buffered']
    #allocation9 [shape = 'u8[512]{0}', space=smem, size = 0x200, scoped, tag = 'output window, operand 1, single buffered']
    #allocation10 [shape = 's32[1]{0}', space=sflag, size = 0x4, scoped, tag = 'scoped memory for regr_h_loss.1']
    %10 = vsyncpa [#allocation3], 0
    %11 = vsyncpa [#allocation6], 0
    %12 = vsyncpa [#allocation4], 0
    %13 = vsyncpa [#allocation10], 0
    // Predicated region
    $region2: #{regr_h_loss.1} parent=1 // pred_check
      _
    $region3: #{regr_h_loss.1} parent=1 // pred_check_branch
      %15 = sbr.rel (0) target = $region5
    $region4: #{regr_h_loss.1} parent=1 // pred_region
      #allocation12 [shape = 'u32[6]{0}', space=smem, size = 0x18, scoped, tag = 'DMA stride descriptor']
      %s17 = ssub.s32 512, 512
      %18 = vsyncadd [#allocation3], %s17
      %s20 = sshll.u32 1, 14
      %s21 = sxor.u32 4294967295, %s20
      %s23 = sld [smem:[#allocation0]]
      %s24 = sadd.s32 2, %s23
      %s26 = sshll.u32 7, 26
      %s27 = sxor.u32 4294967295, %s26
      %s28 = sand.u32 0, %s27
      %s29 = sshll.u32 %s24, 26
      %s30 = sor.u32 %s28, %s29
      %s31 = sshll.u32 [#allocation2], 4
      %s32 = int_to_ptr.vmem [resolvable:$true] %s31
      %38 = sst [smem:[#allocation12]] 1024
      %s39 = scalar_lea.smem [#allocation12], 1
      %40 = sst [smem:[%s39]] 256
      %s41 = scalar_lea.smem [#allocation12], 2
      %42 = sst [smem:[%s41]] 2
      %s43 = scalar_lea.smem [#allocation12], 3
      %44 = sst [smem:[%s43]] 128
      %s45 = scalar_lea.smem [#allocation12], 4
      %46 = sst [smem:[%s45]] 128
      %s47 = scalar_lea.smem [#allocation12], 5
      %48 = sst [smem:[%s47]] 8
      %50 = dma.general %s0, 512, %s32, [#allocation3], [#allocation11], [#allocation12], %s30, 0
    $region5: #{regr_h_loss.1} parent=1 // pred_fallthru
      _
    // Predicated region
    $region6: #{regr_h_loss.1} parent=1 // pred_check
      _
    $region7: #{regr_h_loss.1} parent=1 // pred_check_branch
      %52 = sbr.rel (0) target = $region9
    $region8: #{regr_h_loss.1} parent=1 // pred_region
      #allocation14 [shape = 'u32[6]{0}', space=smem, size = 0x18, scoped, tag = 'DMA stride descriptor']
      %s54 = ssub.s32 512, 512
      %55 = vsyncadd [#allocation6], %s54
      %s57 = sshll.u32 1, 14
      %s58 = sxor.u32 4294967295, %s57
      %s60 = sld [smem:[#allocation0]]
      %s61 = sadd.s32 2, %s60
      %s63 = sshll.u32 7, 26
      %s64 = sxor.u32 4294967295, %s63
      %s65 = sand.u32 0, %s64
      %s66 = sshll.u32 %s61, 26
      %s67 = sor.u32 %s65, %s66
      %s68 = sshll.u32 [#allocation5], 4
      %s69 = int_to_ptr.vmem [resolvable:$true] %s68
      %75 = sst [smem:[#allocation14]] 512
      %s76 = scalar_lea.smem [#allocation14], 1
      %77 = sst [smem:[%s76]] 256
      %s78 = scalar_lea.smem [#allocation14], 2
      %79 = sst [smem:[%s78]] 2
      %s80 = scalar_lea.smem [#allocation14], 3
      %81 = sst [smem:[%s80]] 128
      %s82 = scalar_lea.smem [#allocation14], 4
      %83 = sst [smem:[%s82]] 128
      %s84 = scalar_lea.smem [#allocation14], 5
      %85 = sst [smem:[%s84]] 8
      %87 = dma.general %s1, 512, %s69, [#allocation6], [#allocation13], [#allocation14], %s67, 0
    $region9: #{regr_h_loss.1} parent=1 // pred_fallthru
      _
    // Predicated region
    $region10: #{regr_h_loss.1} parent=1 // pred_check
      _
    $region11: #{regr_h_loss.1} parent=1 // pred_check_branch
      %89 = sbr.rel (0) target = $region13
    $region12: #{regr_h_loss.1} parent=1 // pred_region
      #allocation16 [shape = 'u32[6]{0}', space=smem, size = 0x18, scoped, tag = 'DMA stride descriptor']
      %s91 = ssub.s32 512, 512
      %92 = vsyncadd [#allocation6], %s91
      %s93 = scalar_lea.hbm %s2, 256
      %s95 = sshll.u32 1, 14
      %s96 = sxor.u32 4294967295, %s95
      %s98 = sld [smem:[#allocation0]]
      %s99 = sadd.s32 2, %s98
      %s101 = sshll.u32 7, 26
      %s102 = sxor.u32 4294967295, %s101
      %s103 = sand.u32 0, %s102
      %s104 = sshll.u32 %s99, 26
      %s105 = sor.u32 %s103, %s104
      %s106 = sshll.u32 [#allocation7], 4
      %s107 = int_to_ptr.vmem [resolvable:$true] %s106
      %113 = sst [smem:[#allocation16]] 512
      %s114 = scalar_lea.smem [#allocation16], 1
      %115 = sst [smem:[%s114]] 256
      %s116 = scalar_lea.smem [#allocation16], 2
      %117 = sst [smem:[%s116]] 2
      %s118 = scalar_lea.smem [#allocation16], 3
      %119 = sst [smem:[%s118]] 128
      %s120 = scalar_lea.smem [#allocation16], 4
      %121 = sst [smem:[%s120]] 128
      %s122 = scalar_lea.smem [#allocation16], 5
      %123 = sst [smem:[%s122]] 8
      %125 = dma.general %s93, 512, %s107, [#allocation6], [#allocation15], [#allocation16], %s105, 0
    $region13: #{regr_h_loss.1} parent=1 // pred_fallthru
      _
    // Predicated region
    $region14: #{regr_h_loss.1} parent=1 // pred_check
      _
    $region15: #{regr_h_loss.1} parent=1 // pred_check_branch
      %127 = sbr.rel (0) target = $region17
    $region16: #{regr_h_loss.1} parent=1 // pred_region
      %128 = dma.done [#allocation3], 512
    $region17: #{regr_h_loss.1} parent=1 // pred_fallthru
      _
    // Predicated region
    $region18: #{regr_h_loss.1} parent=1 // pred_check
      _
    $region19: #{regr_h_loss.1} parent=1 // pred_check_branch
      %130 = sbr.rel (0) target = $region21
    $region20: #{regr_h_loss.1} parent=1 // pred_region
      %131 = dma.done [#allocation6], 512
    $region21: #{regr_h_loss.1} parent=1 // pred_fallthru
      _
    // Predicated region
    $region22: #{regr_h_loss.1} parent=1 // pred_check
      _
    $region23: #{regr_h_loss.1} parent=1 // pred_check_branch
      %133 = sbr.rel (0) target = $region25
    $region24: #{regr_h_loss.1} parent=1 // pred_region
      %134 = dma.done [#allocation6], 512
    $region25: #{regr_h_loss.1} parent=1 // pred_fallthru
      _
    %v135 = vld [vmem:[#allocation2] sm:$0xff]
    %v136 = vld [vmem:[#allocation2 + $0x8] sm:$0xff]
    %v137 = vld [vmem:[#allocation2 + $0x10] sm:$0xff]
    %v138 = vld [vmem:[#allocation2 + $0x18] sm:$0xff]
    %v139 = vld [vmem:[#allocation5] sm:$0xff]
    %v140 = vld [vmem:[#allocation5 + $0x8] sm:$0xff]
    %v141 = vld [vmem:[#allocation5 + $0x10] sm:$0xff]
    %v142 = vld [vmem:[#allocation5 + $0x18] sm:$0xff]
    %v143 = vld [vmem:[#allocation7] sm:$0xff]
    %v144 = vld [vmem:[#allocation7 + $0x8] sm:$0xff]
    %v145 = vld [vmem:[#allocation7 + $0x10] sm:$0xff]
    %v146 = vld [vmem:[#allocation7 + $0x18] sm:$0xff]
    %v147 = vsub.f32 %v135, %v139
    %v148 = vsub.f32 %v136, %v140
    %v149 = vsub.f32 %v137, %v141
    %v150 = vsub.f32 %v138, %v142
    %v151 = vand.u32 2147483647, %v147
    %v152 = vand.u32 2147483647, %v148
    %v153 = vand.u32 2147483647, %v149
    %v154 = vand.u32 2147483647, %v150
    %vm155 = vcmp.lt.f32.partialorder %v151, 1.0
    %vm156 = vcmp.lt.f32.partialorder %v152, 1.0
    %vm157 = vcmp.lt.f32.partialorder %v153, 1.0
    %vm158 = vcmp.lt.f32.partialorder %v154, 1.0
    %v159 = vmul.f32 %v147, 0.5
    %v160 = vmul.f32 %v148, 0.5
    %v161 = vmul.f32 %v149, 0.5
    %v162 = vmul.f32 %v150, 0.5
    %v163 = vmul.f32 %v159, %v147
    %v164 = vmul.f32 %v160, %v148
    %v165 = vmul.f32 %v161, %v149
    %v166 = vmul.f32 %v162, %v150
    %v167 = vsub.f32 %v151, 0.5
    %v168 = vsub.f32 %v152, 0.5
    %v169 = vsub.f32 %v153, 0.5
    %v170 = vsub.f32 %v154, 0.5
    %v171 = vsel %vm155, %v163, %v167
    %v172 = vsel %vm156, %v164, %v168
    %v173 = vsel %vm157, %v165, %v169
    %v174 = vsel %vm158, %v166, %v170
    %v175 = vmul.f32 %v143, %v171
    %v176 = vmul.f32 %v144, %v172
    %v177 = vmul.f32 %v145, %v173
    %v178 = vmul.f32 %v146, %v174
    %vm179 = vcmask 130048
    %v180 = vsel %vm179, %v175, 0.0
    %v181 = vsel %vm179, %v177, 0.0
    %v182 = vadd.f32 %v180, %v181
    %v183 = vsel %vm179, %v176, 0.0
    %v184 = vsel %vm179, %v178, 0.0
    %v185 = vadd.f32 %v183, %v184
    %v186 = vsel %vm179, %v182, 0.0
    %v187 = vsel %vm179, %v185, 0.0
    %v188 = vadd.f32 %v186, %v187
    %189 = vadd.xlane.f32.xlu0 %v188
    %v190 = vpop.xlane.xlu0 %189
    %v191 = vrot.slane %v190, 4
    %v192 = vadd.f32 %v190, %v191
    %v193 = vrot.slane %v192, 2
    %v194 = vadd.f32 %v192, %v193
    %v195 = vrot.slane %v194, 1
    %v196 = vadd.f32 %v194, %v195
    %s197 = vtos %v196
    %s198 = scalar_lea.smem [#allocation8], 0
    %199 = sst [smem:[%s198]] %s197
    %v200 = vsel %vm179, %v143, 0.0
    %v201 = vsel %vm179, %v145, 0.0
    %v202 = vadd.f32 %v200, %v201
    %v203 = vsel %vm179, %v144, 0.0
    %v204 = vsel %vm179, %v146, 0.0
    %v205 = vadd.f32 %v203, %v204
    %v206 = vsel %vm179, %v202, 0.0
    %v207 = vsel %vm179, %v205, 0.0
    %v208 = vadd.f32 %v206, %v207
    %209 = vadd.xlane.f32.xlu0 %v208
    %v210 = vpop.xlane.xlu0 %209
    %v211 = vrot.slane %v210, 4
    %v212 = vadd.f32 %v210, %v211
    %v213 = vrot.slane %v212, 2
    %v214 = vadd.f32 %v212, %v213
    %v215 = vrot.slane %v214, 1
    %v216 = vadd.f32 %v214, %v215
    %s217 = vtos %v216
    %s218 = scalar_lea.smem [#allocation9], 0
    %219 = sst [smem:[%s218]] %s217
    // Predicated region
    $region26: #{regr_h_loss.1} parent=1 // pred_check
      _
    $region27: #{regr_h_loss.1} parent=1 // pred_check_branch
      %221 = sbr.rel (0) target = $region29
    $region28: #{regr_h_loss.1} parent=1 // pred_region
      %s223 = ssub.s32 16, 16
      %224 = vsyncadd [#allocation4], %s223
      %227 = dma.smem_to_hbm [#allocation8], 16, %s3, [#allocation4]
    $region29: #{regr_h_loss.1} parent=1 // pred_fallthru
      _
    // Predicated region
    $region30: #{regr_h_loss.1} parent=1 // pred_check
      _
    $region31: #{regr_h_loss.1} parent=1 // pred_check_branch
      %229 = sbr.rel (0) target = $region33
    $region32: #{regr_h_loss.1} parent=1 // pred_region
      %s231 = ssub.s32 16, 16
      %232 = vsyncadd [#allocation10], %s231
      %235 = dma.smem_to_hbm [#allocation9], 16, %s4, [#allocation10]
    $region33: #{regr_h_loss.1} parent=1 // pred_fallthru
      _
    // Predicated region
    $region34: #{regr_h_loss.1} parent=1 // pred_check
      _
    $region35: #{regr_h_loss.1} parent=1 // pred_check_branch
      %237 = sbr.rel (0) target = $region37
    $region36: #{regr_h_loss.1} parent=1 // pred_region
      %238 = dma.done [#allocation4], 16
    $region37: #{regr_h_loss.1} parent=1 // pred_fallthru
      _
    // Predicated region
    $region38: #{regr_h_loss.1} parent=1 // pred_check
      _
    $region39: #{regr_h_loss.1} parent=1 // pred_check_branch
      %240 = sbr.rel (0) target = $region41
    $region40: #{regr_h_loss.1} parent=1 // pred_region
      %241 = dma.done [#allocation10], 16
    $region41: #{regr_h_loss.1} parent=1 // pred_fallthru
      _
    %242 = sfence
    %243 = vsyncpa [#allocation3], 1
    %244 = vsyncpa [#allocation6], 1
    %245 = vsyncpa [#allocation4], 1
    %246 = vsyncpa [#allocation10], 1

</llo_original>
